<compile_context>
chip_gen: v7x
topology: tpu7x:2x2x1
jax: 0.10.0
libtpu: 0.0.40
codegen_flags: <defaults>
</compile_context>

<pallas_src>
import functools

import jax
import jax.numpy as jnp
from jax.experimental import pallas as pl
from jax.experimental.pallas import tpu as pltpu


IN_F = 4                               # q_proj in/out features
OUT_F = 2                              # out_proj out features
TOKENS_PER_ROW = 64                    # 64 tokens/packed row
IN_LANES = TOKENS_PER_ROW * IN_F       # 256 input lanes
OUT_LANES = TOKENS_PER_ROW * OUT_F     # 128 output lanes (unmasked stores)


def _fused_linear_kernel(x_ref, w_ref, b_ref, o_ref):
    """o = x_packed @ W_blockdiag + b_tiled  (one lane-dense MXU matmul)."""
    # x_ref: (tr, 256), w_ref: (256, 128), b_ref: (1, 128), o_ref: (tr, 128)
    o_ref[...] = (
        jnp.dot(x_ref[...], w_ref[...], preferred_element_type=jnp.float32)
        + b_ref[...]
    ).astype(o_ref.dtype)


def fuse_params(params):
    """Fuse the two bias-linears and bake the block-diagonal weight (call once)."""
    w1, b1, w2, b2 = params            # w1: (4,4), b1: (4,), w2: (2,4), b2: (2,)
    w_fused = w1.T @ w2.T                                              # (4, 2)
    b_fused = b1 @ w2.T + b2                                           # (2,)
    w_bd = jnp.kron(jnp.eye(TOKENS_PER_ROW, dtype=w_fused.dtype), w_fused)  # (256,128)
    b_bd = jnp.tile(b_fused, TOKENS_PER_ROW).reshape(1, OUT_LANES)          # (1,128)
    return w_bd, b_bd


def _choose_row_tile(num_rows, block_rows, target_steps=4):
    """Row tile (multiple of 8) giving >= target_steps grid steps when possible."""
    tr = 8 * pl.cdiv(num_rows, 8 * target_steps)
    return max(8, min(block_rows, tr))


@functools.partial(jax.jit, static_argnames=("block_rows",))
def my_model_forward(x, w_bd, b_bd, *, block_rows=2048):
    """x: (B, S, 4) float32 -> (B, S, 2) float32."""
    B, S, D_in = x.shape
    assert D_in == IN_F

    M = B * S
    R = pl.cdiv(M, TOKENS_PER_ROW)          # packed rows
    M_row = R * TOKENS_PER_ROW              # tokens after <=63-token tail pad

    x2d = x.reshape(M, IN_F)
    if M_row != M:                          # tiny tail pad only (<= 1 KiB)
        x2d = jnp.concatenate(
            [x2d, jnp.zeros((M_row - M, IN_F), x2d.dtype)], axis=0)
    # Row-major reinterpretation only -- no data shuffle.
    x_packed = x2d.reshape(R, IN_LANES)     # (R, 256)

    tr = _choose_row_tile(R, block_rows)
    grid = (pl.cdiv(R, tr),)                # ragged last block masked by Pallas

    bytes_accessed = 4 * (x_packed.size + R * OUT_LANES + w_bd.size + b_bd.size)
    cost = pl.CostEstimate(flops=2 * M * IN_F * OUT_F, transcendentals=0,
                           bytes_accessed=bytes_accessed)

    out_packed = pl.pallas_call(
        _fused_linear_kernel,
        out_shape=jax.ShapeDtypeStruct((R, OUT_LANES), jnp.float32),
        grid=grid,
        in_specs=[
            pl.BlockSpec((tr, IN_LANES), lambda i: (i, 0)),         # x rows (tiled)
            pl.BlockSpec((IN_LANES, OUT_LANES), lambda i: (0, 0)),  # fused W (fetched once)
            pl.BlockSpec((1, OUT_LANES), lambda i: (0, 0)),         # fused bias (fetched once)
        ],
        out_specs=pl.BlockSpec((tr, OUT_LANES), lambda i: (i, 0)),
        compiler_params=pltpu.CompilerParams(
            dimension_semantics=("parallel",)),                     # megacore sharding
        cost_estimate=cost,
    )(x_packed, w_bd, b_bd)

    out2d = out_packed.reshape(M_row, OUT_F)
    if M_row != M:
        out2d = out2d[:M]                   # drop <=63 padded tokens
    return out2d.reshape(B, S, OUT_F)


def init_params(key):
    """Deterministic nn.Linear-style init: U(-1/sqrt(fan_in), 1/sqrt(fan_in))."""
    k1, k2, k3, k4 = jax.random.split(key, 4)
    bound = 1.0 / jnp.sqrt(4.0)
    w1 = jax.random.uniform(k1, (4, 4), jnp.float32, -bound, bound)  # q_proj.weight
    b1 = jax.random.uniform(k2, (4,), jnp.float32, -bound, bound)    # q_proj.bias
    w2 = jax.random.uniform(k3, (2, 4), jnp.float32, -bound, bound)  # out_proj.weight
    b2 = jax.random.uniform(k4, (2,), jnp.float32, -bound, bound)    # out_proj.bias
    return w1, b1, w2, b2


if __name__ == "__main__":
    key = jax.random.PRNGKey(0)
    kp, kx = jax.random.split(key)
    params = init_params(kp)
    w1, b1, w2, b2 = params
    w_bd, b_bd = fuse_params(params)        # built once, reused across calls

    def reference(x):
        return (x @ w1.T + b1) @ w2.T + b2

    # Small shapes consistent with the module; cases exercise the <=63-token
    # tail pad, a ragged (block > rows) single-step grid, and multi-step grids.
    cases = [
        (2, 8),      # M=16   -> R=1, one ragged block
        (3, 70),     # M=210  -> R=4, tail pad + ragged block
        (4, 512),    # M=2048 -> R=32, grid of 4 (pipelined, megacore-splittable)
        (2, 2048),   # M=4096 -> R=64, grid of 4 with tr=16
    ]
    for B, S in cases:
        x = jax.random.normal(jax.random.fold_in(kx, B * 1000 + S),
                              (B, S, 4), jnp.float32)
        out = jax.block_until_ready(my_model_forward(x, w_bd, b_bd))
        ref = reference(x)
        assert out.shape == (B, S, 2)
        assert jnp.allclose(out, ref, atol=1e-5, rtol=1e-5), (
            f"max abs err {float(jnp.max(jnp.abs(out - ref)))}")

    print("KERNEL_OK")
</pallas_src>

<mosaic_0001>
module attributes {stable_mosaic.version = 11 : i64} {
  func.func @_fused_linear_kernel(%arg0: i32, %arg1: memref<8x256xf32, #tpu.memory_space<vmem>>, %arg2: memref<256x128xf32, #tpu.memory_space<vmem>>, %arg3: memref<1x128xf32, #tpu.memory_space<vmem>>, %arg4: memref<8x128xf32, #tpu.memory_space<vmem>>) attributes {dimension_semantics = [#tpu.dimension_semantics<parallel>], iteration_bounds = array<i64: 1>, scalar_prefetch = 0 : i64, scratch_operands = 0 : i64, tpu.core_type = #tpu.core_type<tc>, window_params = [{transform_indices = @transform_0, window_bounds = array<i64: 8, 256>}, {pipeline_mode = #tpu.pipeline_mode<synchronous>, transform_indices = @transform_1, window_bounds = array<i64: 256, 128>}, {pipeline_mode = #tpu.pipeline_mode<synchronous>, transform_indices = @transform_2, window_bounds = array<i64: 1, 128>}, {transform_indices = @transform_3, window_bounds = array<i64: 8, 128>}]} {
    %c0 = arith.constant 0 : index
    %c0_0 = arith.constant 0 : index
    %0 = vector.load %arg1[%c0, %c0_0] : memref<8x256xf32, #tpu.memory_space<vmem>>, vector<8x256xf32>
    %c0_1 = arith.constant 0 : index
    %c0_2 = arith.constant 0 : index
    %1 = vector.load %arg2[%c0_1, %c0_2] : memref<256x128xf32, #tpu.memory_space<vmem>>, vector<256x128xf32>
    %cst = arith.constant dense<0.000000e+00> : vector<8x128xf32>
    %2 = tpu.matmul %0, %1, %cst {dimension_numbers = #tpu.dot_dimension_numbers<[1], [0], [0], [1], [0, 0, 1, 1], [], []>} : vector<8x256xf32>, vector<256x128xf32>, vector<8x128xf32> -> vector<8x128xf32>
    %c0_3 = arith.constant 0 : index
    %c0_4 = arith.constant 0 : index
    %3 = vector.load %arg3[%c0_3, %c0_4] : memref<1x128xf32, #tpu.memory_space<vmem>>, vector<1x128xf32>
    %4 = vector.broadcast %3 : vector<1x128xf32> to vector<8x128xf32>
    %5 = arith.addf %2, %4 : vector<8x128xf32>
    %c0_5 = arith.constant 0 : index
    %c0_6 = arith.constant 0 : index
    %6 = vector.load %arg4[%c0_5, %c0_6] : memref<8x128xf32, #tpu.memory_space<vmem>>, vector<8x128xf32>
    tpu.vector_store %arg4[%c0_5, %c0_6], %5 {strides = array<i32>} : memref<8x128xf32, #tpu.memory_space<vmem>>, vector<8x128xf32>,
    return
  }
  func.func @transform_0(%arg0: i32) -> (i32, i32) {
    %c0_i32 = arith.constant 0 : i32
    %c0_i32_0 = arith.constant 0 : i32
    return %arg0, %c0_i32 : i32, i32
  }
  func.func @transform_1(%arg0: i32) -> (i32, i32) {
    %c0_i32 = arith.constant 0 : i32
    %c0_i32_0 = arith.constant 0 : i32
    %c0_i32_1 = arith.constant 0 : i32
    return %c0_i32, %c0_i32_0 : i32, i32
  }
  func.func @transform_2(%arg0: i32) -> (i32, i32) {
    %c0_i32 = arith.constant 0 : i32
    %c0_i32_0 = arith.constant 0 : i32
    %c0_i32_1 = arith.constant 0 : i32
    return %c0_i32, %c0_i32_0 : i32, i32
  }
  func.func @transform_3(%arg0: i32) -> (i32, i32) {
    %c0_i32 = arith.constant 0 : i32
    %c0_i32_0 = arith.constant 0 : i32
    return %arg0, %c0_i32 : i32, i32
  }
}

</mosaic_0001>

<llo_original>
// kernel: my_model_forward.1
$region0: #{my_model_forward.1}
  #allocation0 [shape = 'u32[]', space=smem, size = 0x4, offset = 0x4, fixed_abs, tag = 'smem constant byte address 0x4 - core index']
  #allocation1 [shape = 'u32[144,128]{1,0:T(1,128)}', space=vmem, size = 0x12000, scoped, tag = 'internal scratch']
  %s0 = inlined_call_operand.vmem [shape: f32[1,256], index: 0, kind: input, shape index: {}]
  %s1 = inlined_call_operand.hbm [shape: f32[256,128], index: 1, kind: input, shape index: {}]
  %s2 = inlined_call_operand.vmem [shape: f32[1,128], index: 2, kind: input, shape index: {}]
  %s3 = inlined_call_operand.vmem [shape: f32[1,128], index: 3, kind: output, shape index: {}]
  %s4 = sld [smem:[#allocation0]]
  $region56: #{my_model_forward.1} parent=0
    _
  %s6 = ssub.s32 1, %s4
  %s7 = scalar_select 0, %s6, %s4
  $region1: #{my_model_forward.1} parent=0
    #allocation2 [shape = 'u8[131072]{0}', space=vmem, size = 0x20000, scoped, tag = 'input window, operand 1, single buffered']
    #allocation3 [shape = 's32[1]{0}', space=sflag, size = 0x4, scoped, tag = 'scoped memory for my_model_forward.1']
    #allocation4 [shape = 'u8[4096]{0}', space=vmem, size = 0x1000, scoped, tag = 'output window, operand 0, single buffered']
    %8 = vsyncpa [#allocation3], 0
    // Predicated region
    $region2: #{my_model_forward.1} parent=1 // pred_check
      _
    $region3: #{my_model_forward.1} parent=1 // pred_check_branch
      %10 = sbr.rel (0) target = $region5
    $region4: #{my_model_forward.1} parent=1 // pred_region
      _
    $region5: #{my_model_forward.1} parent=1 // pred_fallthru
      _
    // Predicated region
    $region6: #{my_model_forward.1} parent=1 // pred_check
      _
    $region7: #{my_model_forward.1} parent=1 // pred_check_branch
      %12 = sbr.rel (0) target = $region9
    $region8: #{my_model_forward.1} parent=1 // pred_region
      %s14 = ssub.s32 4096, 4096
      %15 = vsyncadd [#allocation3], %s14
      %s16 = sshll.u32 [#allocation2], 4
      %s17 = int_to_ptr.vmem [resolvable:$true] %s16
      %22 = dma.hbm_to_vmem [thread:$0]  %s1, 4096, %s17, [#allocation3], 128, 128, 8
    $region9: #{my_model_forward.1} parent=1 // pred_fallthru
      _
    // Predicated region
    $region10: #{my_model_forward.1} parent=1 // pred_check
      _
    $region11: #{my_model_forward.1} parent=1 // pred_check_branch
      %24 = sbr.rel (0) target = $region13
    $region12: #{my_model_forward.1} parent=1 // pred_region
      _
    $region13: #{my_model_forward.1} parent=1 // pred_fallthru
      _
    // Predicated region
    $region14: #{my_model_forward.1} parent=1 // pred_check
      _
    $region15: #{my_model_forward.1} parent=1 // pred_check_branch
      %26 = sbr.rel (0) target = $region17
    $region16: #{my_model_forward.1} parent=1 // pred_region
      %27 = dma.done [#allocation3], 4096
    $region17: #{my_model_forward.1} parent=1 // pred_fallthru
      _
    %v28 = vld [vmem:[%s0] sm:$0x3]
    %v29 = vld [vmem:[%s0 + $0x2] sm:$0x3]
    %v30 = vld [vmem:[%s0 + $0x4] sm:$0x3]
    %v31 = vld [vmem:[%s0 + $0x6] sm:$0x3]
    %v32 = vld [vmem:[%s0 + $0x8] sm:$0x3]
    %v33 = vld [vmem:[%s0 + $0xa] sm:$0x3]
    %v34 = vld [vmem:[%s0 + $0xc] sm:$0x3]
    %v35 = vld [vmem:[%s0 + $0xe] sm:$0x3]
    %v36 = vld [vmem:[#allocation2] sm:$0xff]
    %v37 = vld [vmem:[#allocation2 + $0x8] sm:$0xff]
    %v38 = vld [vmem:[#allocation2 + $0x10] sm:$0xff]
    %v39 = vld [vmem:[#allocation2 + $0x18] sm:$0xff]
    %v40 = vld [vmem:[#allocation2 + $0x20] sm:$0xff]
    %v41 = vld [vmem:[#allocation2 + $0x28] sm:$0xff]
    %v42 = vld [vmem:[#allocation2 + $0x30] sm:$0xff]
    %v43 = vld [vmem:[#allocation2 + $0x38] sm:$0xff]
    %v44 = vld [vmem:[#allocation2 + $0x40] sm:$0xff]
    %v45 = vld [vmem:[#allocation2 + $0x48] sm:$0xff]
    %v46 = vld [vmem:[#allocation2 + $0x50] sm:$0xff]
    %v47 = vld [vmem:[#allocation2 + $0x58] sm:$0xff]
    %v48 = vld [vmem:[#allocation2 + $0x60] sm:$0xff]
    %v49 = vld [vmem:[#allocation2 + $0x68] sm:$0xff]
    %v50 = vld [vmem:[#allocation2 + $0x70] sm:$0xff]
    %v51 = vld [vmem:[#allocation2 + $0x78] sm:$0xff]
    %v52 = vld [vmem:[#allocation2 + $0x80] sm:$0xff]
    %v53 = vld [vmem:[#allocation2 + $0x88] sm:$0xff]
    %v54 = vld [vmem:[#allocation2 + $0x90] sm:$0xff]
    %v55 = vld [vmem:[#allocation2 + $0x98] sm:$0xff]
    %v56 = vld [vmem:[#allocation2 + $0xa0] sm:$0xff]
    %v57 = vld [vmem:[#allocation2 + $0xa8] sm:$0xff]
    %v58 = vld [vmem:[#allocation2 + $0xb0] sm:$0xff]
    %v59 = vld [vmem:[#allocation2 + $0xb8] sm:$0xff]
    %v60 = vld [vmem:[#allocation2 + $0xc0] sm:$0xff]
    %v61 = vld [vmem:[#allocation2 + $0xc8] sm:$0xff]
    %v62 = vld [vmem:[#allocation2 + $0xd0] sm:$0xff]
    %v63 = vld [vmem:[#allocation2 + $0xd8] sm:$0xff]
    %v64 = vld [vmem:[#allocation2 + $0xe0] sm:$0xff]
    %v65 = vld [vmem:[#allocation2 + $0xe8] sm:$0xff]
    %v66 = vld [vmem:[#allocation2 + $0xf0] sm:$0xff]
    %v67 = vld [vmem:[#allocation2 + $0xf8] sm:$0xff]
    %v68 = vld [vmem:[%s2] sm:$0x1]
    %v70 = vlaneseq
    %v71 = vshrl.u32 %v70, 7
    %v72 = vsub.s32 0, %v71
    %v73 = vrot.slane %v68, %v72
    %v83 = vcombine.low %v28, %v29
    %v84 = vcombine.low %v30, %v31
    %v85 = vcombine.low %v32, %v33
    %v86 = vcombine.low %v34, %v35
    %v88 = vunpack.c.l.s4 1966171168
    %v89 = vunpack.c.0.s8 %v88
    %v90 = vlaneseq
    %v91 = vshrl.u32 %v90, 7
    %v92 = vsub.s32 %v89, %v91
    %v93 = vrot.slane %v83, %v92
    %v95 = vunpack.c.l.s4 1966171168
    %v96 = vunpack.c.0.s8 %v95
    %v97 = vlaneseq
    %v98 = vshrl.u32 %v97, 7
    %v99 = vsub.s32 %v96, %v98
    %v100 = vrot.slane %v84, %v99
    %v102 = vunpack.c.l.s4 1966171168
    %v103 = vunpack.c.0.s8 %v102
    %v104 = vlaneseq
    %v105 = vshrl.u32 %v104, 7
    %v106 = vsub.s32 %v103, %v105
    %v107 = vrot.slane %v85, %v106
    %v109 = vunpack.c.l.s4 1966171168
    %v110 = vunpack.c.0.s8 %v109
    %v111 = vlaneseq
    %v112 = vshrl.u32 %v111, 7
    %v113 = vsub.s32 %v110, %v112
    %v114 = vrot.slane %v86, %v113
    %v115 = vcombine.low %v93, %v100
    %v116 = vcombine.high %v93, %v100
    %v117 = vcombine.low %v107, %v114
    %v118 = vcombine.high %v107, %v114
    %v120 = vunpack.c.l.s4 1966171168
    %v121 = vunpack.c.0.s8 %v120
    %v122 = vlaneseq
    %v123 = vshrl.u32 %v122, 7
    %v124 = vsub.s32 %v121, %v123
    %v125 = vrot.slane %v115, %v124
    %v127 = vunpack.c.l.s4 1966171168
    %v128 = vunpack.c.0.s8 %v127
    %v129 = vlaneseq
    %v130 = vshrl.u32 %v129, 7
    %v131 = vsub.s32 %v128, %v130
    %v132 = vrot.slane %v116, %v131
    %v134 = vunpack.c.l.s4 1966171168
    %v135 = vunpack.c.0.s8 %v134
    %v136 = vlaneseq
    %v137 = vshrl.u32 %v136, 7
    %v138 = vsub.s32 %v135, %v137
    %v139 = vrot.slane %v117, %v138
    %v141 = vunpack.c.l.s4 1966171168
    %v142 = vunpack.c.0.s8 %v141
    %v143 = vlaneseq
    %v144 = vshrl.u32 %v143, 7
    %v145 = vsub.s32 %v142, %v144
    %v146 = vrot.slane %v118, %v145
    %v147 = vcombine.low %v125, %v139
    %v148 = vcombine.low %v132, %v146
    %151 = vmatprep.subr.mxu0 0.0
    %152 = vmatpush1.msra.mxu0 %v36
    %153 = vmatprep.subr.mxu0 0.0
    %154 = vmatpush1.msra.mxu0 %v37
    %155 = vmatprep.subr.mxu0 0.0
    %156 = vmatpush1.msra.mxu0 %v38
    %157 = vmatprep.subr.mxu0 0.0
    %158 = vmatpush1.msra.mxu0 %v39
    %159 = vmatprep.subr.mxu0 0.0
    %160 = vmatpush1.msra.mxu0 %v40
    %161 = vmatprep.subr.mxu0 0.0
    %162 = vmatpush1.msra.mxu0 %v41
    %163 = vmatprep.subr.mxu0 0.0
    %164 = vmatpush1.msra.mxu0 %v42
    %165 = vmatprep.subr.mxu0 0.0
    %166 = vmatpush1.msra.mxu0 %v43
    %167 = vmatprep.subr.mxu0 0.0
    %168 = vmatpush1.msra.mxu0 %v44
    %169 = vmatprep.subr.mxu0 0.0
    %170 = vmatpush1.msra.mxu0 %v45
    %171 = vmatprep.subr.mxu0 0.0
    %172 = vmatpush1.msra.mxu0 %v46
    %173 = vmatprep.subr.mxu0 0.0
    %174 = vmatpush1.msra.mxu0 %v47
    %175 = vmatprep.subr.mxu0 0.0
    %176 = vmatpush1.msra.mxu0 %v48
    %177 = vmatprep.subr.mxu0 0.0
    %178 = vmatpush1.msra.mxu0 %v49
    %179 = vmatprep.subr.mxu0 0.0
    %180 = vmatpush1.msra.mxu0 %v50
    %181 = vmatprep.subr.mxu0 0.0
    %182 = vmatpush1.msra.mxu0 %v51
    %183 = vmatprep.subr.mxu0 0.0
    %184 = vmatpush1.msra.mxu0 %v52
    %185 = vmatprep.subr.mxu0 0.0
    %186 = vmatpush1.msra.mxu0 %v53
    %187 = vmatprep.subr.mxu0 0.0
    %188 = vmatpush1.msra.mxu0 %v54
    %189 = vmatprep.subr.mxu0 0.0
    %190 = vmatpush1.msra.mxu0 %v55
    %191 = vmatprep.subr.mxu0 0.0
    %192 = vmatpush1.msra.mxu0 %v56
    %193 = vmatprep.subr.mxu0 0.0
    %194 = vmatpush1.msra.mxu0 %v57
    %195 = vmatprep.subr.mxu0 0.0
    %196 = vmatpush1.msra.mxu0 %v58
    %197 = vmatprep.subr.mxu0 0.0
    %198 = vmatpush1.msra.mxu0 %v59
    %199 = vmatprep.subr.mxu0 0.0
    %200 = vmatpush1.msra.mxu0 %v60
    %201 = vmatprep.subr.mxu0 0.0
    %202 = vmatpush1.msra.mxu0 %v61
    %203 = vmatprep.subr.mxu0 0.0
    %204 = vmatpush1.msra.mxu0 %v62
    %205 = vmatprep.subr.mxu0 0.0
    %206 = vmatpush1.msra.mxu0 %v63
    %207 = vmatprep.subr.mxu0 0.0
    %208 = vmatpush1.msra.mxu0 %v64
    %209 = vmatprep.subr.mxu0 0.0
    %210 = vmatpush1.msra.mxu0 %v65
    %211 = vmatprep.subr.mxu0 0.0
    %212 = vmatpush1.msra.mxu0 %v66
    %213 = vmatprep.subr.mxu0 0.0
    %214 = vmatpush1.msra.mxu0 %v67
    %215 = vmatprep.mubr.f32.mxu0 %v148
    %216 = vmatmul.mubr.f32.gmra.mrb[0].mxu0 %v147
    %v217 = vpop.f32.mrb[0].mxu0
    %v218 = vadd.f32 %v73, %v217
    %v219 = vpop.f32.mrb[0].mxu0
    %220 = vdwg.mxu0
    %221 = vst [vmem:[#allocation4] sm:$0xff] %v218
    // Predicated region
    $region18: #{my_model_forward.1} parent=1 // pred_check
      _
    $region19: #{my_model_forward.1} parent=1 // pred_check_branch
      %223 = sbr.rel (0) target = $region21
    $region20: #{my_model_forward.1} parent=1 // pred_region
      // Predicated region
      $region22: #{my_model_forward.1} parent=20 // pred_check
        _
      $region23: #{my_model_forward.1} parent=20 // pred_check_branch
        %225 = sbr.rel (0) target = $region25
      $region24: #{my_model_forward.1} parent=20 // pred_region
        // Predicated region
        $region26: #{my_model_forward.1} parent=24 // pred_check
          _
        $region27: #{my_model_forward.1} parent=24 // pred_check_branch
          %227 = sbr.rel target = $region29
        $region28: #{my_model_forward.1} parent=24 // pred_region
          // Predicated region
          $region41: #{my_model_forward.1} parent=28 // pred_check
            _
          $region42: #{my_model_forward.1} parent=28 // pred_check_branch
            %242 = sbr.rel (0) target = $region44
          $region43: #{my_model_forward.1} parent=28 // pred_region
            loop: start=0, step=1, limit=1
            $region45: #{my_model_forward.1} parent=43 // loop_pre_header
              _
            $region46: #{my_model_forward.1} parent=43 // loop_header
              %s245 = sphi 0, %s249
              %p246 = scmp.ge.s32.totalorder %s245, 1
              %s250 = sphi [#allocation4], [#allocation4]
              %s251 = sphi %s3, %s3
            $region47: #{my_model_forward.1} parent=43 // loop_header_branch
              %248 = sbr.rel (%p246) target = $region51
            $region48: #{my_model_forward.1} parent=43 // loop_body
              %v252 = vld [vmem:[%s250] sm:$0x1]
              %253 = vst [vmem:[%s251] sm:$0x1] %v252
            $region49: #{my_model_forward.1} parent=43 // loop_footer
              %s249 = sadd.s32 1, %s245
            $region50: #{my_model_forward.1} parent=43 // loop_footer_branch
              %244 = sbr.rel target = $region46
            $region51: #{my_model_forward.1} parent=43 // loop_exit
              _
          $region44: #{my_model_forward.1} parent=28 // pred_fallthru
            _
        $region29: #{my_model_forward.1} parent=24 // pred_fallthru
          _
        // Predicated region
        $region30: #{my_model_forward.1} parent=24 // pred_check
          _
        $region31: #{my_model_forward.1} parent=24 // pred_check_branch
          %229 = sbr.rel (0) target = $region33
        $region32: #{my_model_forward.1} parent=24 // pred_region
          loop: start=0, step=1, limit=1
          $region34: #{my_model_forward.1} parent=32 // loop_pre_header
            _
          $region35: #{my_model_forward.1} parent=32 // loop_header
            %s232 = sphi 0, %s236
            %p233 = scmp.ge.s32.totalorder %s232, 1
            %s237 = sphi [#allocation4], [#allocation4]
            %s238 = sphi %s3, %s3
          $region36: #{my_model_forward.1} parent=32 // loop_header_branch
            %235 = sbr.rel (%p233) target = $region40
          $region37: #{my_model_forward.1} parent=32 // loop_body
            %v239 = vld [vmem:[%s237] sm:$0x1]
            %240 = vst [vmem:[%s238] sm:$0x1] %v239
          $region38: #{my_model_forward.1} parent=32 // loop_footer
            %s236 = sadd.s32 1, %s232
          $region39: #{my_model_forward.1} parent=32 // loop_footer_branch
            %231 = sbr.rel target = $region35
          $region40: #{my_model_forward.1} parent=32 // loop_exit
            _
        $region33: #{my_model_forward.1} parent=24 // pred_fallthru
          _
      $region25: #{my_model_forward.1} parent=20 // pred_fallthru
        _
      %254 = vnop
    $region21: #{my_model_forward.1} parent=1 // pred_fallthru
      _
    // Predicated region
    $region52: #{my_model_forward.1} parent=1 // pred_check
      _
    $region53: #{my_model_forward.1} parent=1 // pred_check_branch
      %256 = sbr.rel (0) target = $region55
    $region54: #{my_model_forward.1} parent=1 // pred_region
      _
    $region55: #{my_model_forward.1} parent=1 // pred_fallthru
      _
    %257 = vsyncpa [#allocation3], 1

</llo_original>
